<compile_context>
chip_gen: v5e
topology: v5e:2x2
jax: 0.10.0
libtpu: 0.0.40
codegen_flags: <defaults>
</compile_context>

<pallas_src>
import jax
import jax.numpy as jnp
from jax.experimental import pallas as pl
from jax.experimental.pallas import tpu as pltpu

_SHIFT = (-0.030, -0.088, -0.188)
_SCALE = (0.458, 0.448, 0.450)
# Fold (x - shift) / scale  ->  x * inv + bias   (computed at trace time)
_INV = tuple(1.0 / s for s in _SCALE)
_BIAS = tuple(-sh / s for sh, s in zip(_SHIFT, _SCALE))

_LANES = 128
_MAX_ROWS_PER_TILE = 2048    # 2048 x 128 f32 = 1 MiB per block buffer (dense path)
_MAX_FLAT_TILE = 32 * 1024   # fallback path tile (kept small: sublane-padded layout)


def _select_consts(channel):
    """Scalar 3-way select of the per-channel affine constants."""
    inv = jnp.where(channel == 0, _INV[0],
                    jnp.where(channel == 1, _INV[1], _INV[2]))
    bias = jnp.where(channel == 0, _BIAS[0],
                     jnp.where(channel == 1, _BIAS[1], _BIAS[2]))
    return inv, bias


def _scaling_kernel(x_ref, o_ref):
    # Grid axis 0 walks the flattened (N, C) rows -> channel = row % 3.
    channel = pl.program_id(0) % 3
    inv, bias = _select_consts(channel)
    x = x_ref[...].astype(jnp.float32)
    o_ref[...] = (x * inv + bias).astype(o_ref.dtype)


def scaling_layer(x: jax.Array) -> jax.Array:
    """x: (N, 3, H, W) -> (N, 3, H, W); out = (x - shift) / scale."""
    n, c, h, w = x.shape
    assert c == 3, "ScalingLayer expects 3 channels (RGB)."
    hw = h * w
    rows = n * c

    if hw % _LANES == 0:
        # Lane-dense path: view each channel's pixels as (sub_rows, 128).
        sub = hw // _LANES
        r_tile = min(sub, _MAX_ROWS_PER_TILE)
        x3 = x.reshape(rows, sub, _LANES)
        out = pl.pallas_call(
            _scaling_kernel,
            out_shape=jax.ShapeDtypeStruct((rows, sub, _LANES), x.dtype),
            grid=(rows, pl.cdiv(sub, r_tile)),
            in_specs=[pl.BlockSpec((1, r_tile, _LANES), lambda r, s: (r, s, 0))],
            out_specs=pl.BlockSpec((1, r_tile, _LANES), lambda r, s: (r, s, 0)),
            compiler_params=pltpu.CompilerParams(
                dimension_semantics=("parallel", "parallel")),
        )(x3)
    else:
        # Fallback for odd spatial sizes: flat (rows, H*W) layout. Correct but
        # stores are lane-masked when H*W is not a multiple of 128.
        t = min(hw, _MAX_FLAT_TILE)
        x2 = x.reshape(rows, hw)
        out = pl.pallas_call(
            _scaling_kernel,
            out_shape=jax.ShapeDtypeStruct((rows, hw), x.dtype),
            grid=(rows, pl.cdiv(hw, t)),
            in_specs=[pl.BlockSpec((1, t), lambda r, s: (r, s))],
            out_specs=pl.BlockSpec((1, t), lambda r, s: (r, s)),
            compiler_params=pltpu.CompilerParams(
                dimension_semantics=("parallel", "parallel")),
        )(x2)

    return out.reshape(n, c, h, w)


def scaling_layer_ref(x: jax.Array) -> jax.Array:
    """Pure-JAX reference matching the PyTorch forward (uses a real divide)."""
    shift = jnp.array(_SHIFT, dtype=jnp.float32)[None, :, None, None]
    scale = jnp.array(_SCALE, dtype=jnp.float32)[None, :, None, None]
    return (x - shift) / scale


if __name__ == "__main__":
    key = jax.random.PRNGKey(0)

    # Main check: lane-dense path (H*W = 256, a multiple of 128).
    x = jax.random.normal(key, (2, 3, 16, 16), dtype=jnp.float32)
    out = scaling_layer(x)
    jax.block_until_ready(out)
    ref = scaling_layer_ref(x)
    assert out.shape == ref.shape and out.dtype == ref.dtype
    assert jnp.allclose(out, ref, atol=1e-5, rtol=1e-5), "mismatch vs reference"

    # Secondary check: fallback path for H*W not a multiple of 128.
    x2 = jax.random.normal(jax.random.PRNGKey(1), (1, 3, 5, 7), dtype=jnp.float32)
    out2 = scaling_layer(x2)
    jax.block_until_ready(out2)
    ref2 = scaling_layer_ref(x2)
    assert jnp.allclose(out2, ref2, atol=1e-5, rtol=1e-5), "mismatch (fallback path)"

    print("KERNEL_OK")
</pallas_src>

<mosaic_0001>
module attributes {stable_mosaic.version = 11 : i64} {
  func.func @_scaling_kernel(%arg0: i32, %arg1: i32, %arg2: memref<1x2x128xf32, #tpu.memory_space<vmem>>, %arg3: memref<1x2x128xf32, #tpu.memory_space<vmem>>) attributes {dimension_semantics = [#tpu.dimension_semantics<parallel>, #tpu.dimension_semantics<parallel>], iteration_bounds = array<i64: 6, 1>, scalar_prefetch = 0 : i64, scratch_operands = 0 : i64, tpu.core_type = #tpu.core_type<tc>, window_params = [{transform_indices = @transform_0, window_bounds = array<i64: 1, 2, 128>}, {transform_indices = @transform_1, window_bounds = array<i64: 1, 2, 128>}]} {
    %c3_i32 = arith.constant 3 : i32
    %c0_i32 = arith.constant 0 : i32
    %0 = arith.cmpi eq, %c3_i32, %c0_i32 : i32
    %c1_i32 = arith.constant 1 : i32
    %1 = arith.select %0, %c1_i32, %c3_i32 : i32
    %2 = arith.remsi %arg0, %1 : i32
    %c0_i32_0 = arith.constant 0 : i32
    %3 = arith.cmpi ne, %2, %c0_i32_0 : i32
    %c0_i32_1 = arith.constant 0 : i32
    %4 = arith.cmpi slt, %2, %c0_i32_1 : i32
    %c0_i32_2 = arith.constant 0 : i32
    %5 = arith.cmpi slt, %1, %c0_i32_2 : i32
    %6 = arith.xori %4, %5 : i1
    %7 = arith.andi %6, %3 : i1
    %8 = arith.addi %2, %1 : i32
    %9 = arith.select %7, %8, %2 : i32
    %c0_i32_3 = arith.constant 0 : i32
    %10 = arith.cmpi eq, %9, %c0_i32_3 : i32
    %c1_i32_4 = arith.constant 1 : i32
    %11 = arith.cmpi eq, %9, %c1_i32_4 : i32
    %cst = arith.constant 2.23214293 : f32
    %cst_5 = arith.constant 2.22222233 : f32
    %12 = arith.select %11, %cst, %cst_5 : f32
    %cst_6 = arith.constant 2.18340611 : f32
    %13 = arith.select %10, %cst_6, %12 : f32
    %c0_i32_7 = arith.constant 0 : i32
    %14 = arith.cmpi eq, %9, %c0_i32_7 : i32
    %c1_i32_8 = arith.constant 1 : i32
    %15 = arith.cmpi eq, %9, %c1_i32_8 : i32
    %cst_9 = arith.constant 0.196428567 : f32
    %cst_10 = arith.constant 0.417777777 : f32
    %16 = arith.select %15, %cst_9, %cst_10 : f32
    %cst_11 = arith.constant 0.0655021816 : f32
    %17 = arith.select %14, %cst_11, %16 : f32
    %c0 = arith.constant 0 : index
    %c0_12 = arith.constant 0 : index
    %c0_13 = arith.constant 0 : index
    %18 = vector.load %arg2[%c0, %c0_12, %c0_13] : memref<1x2x128xf32, #tpu.memory_space<vmem>>, vector<1x2x128xf32>
    %19 = vector.broadcast %13 : f32 to vector<1x2x128xf32>
    %20 = arith.mulf %18, %19 : vector<1x2x128xf32>
    %21 = vector.broadcast %17 : f32 to vector<1x2x128xf32>
    %22 = arith.addf %20, %21 : vector<1x2x128xf32>
    %c0_14 = arith.constant 0 : index
    %c0_15 = arith.constant 0 : index
    %c0_16 = arith.constant 0 : index
    %23 = vector.load %arg3[%c0_14, %c0_15, %c0_16] : memref<1x2x128xf32, #tpu.memory_space<vmem>>, vector<1x2x128xf32>
    tpu.vector_store %arg3[%c0_14, %c0_15, %c0_16], %22 {strides = array<i32>} : memref<1x2x128xf32, #tpu.memory_space<vmem>>, vector<1x2x128xf32>,
    return
  }
  func.func @transform_0(%arg0: i32, %arg1: i32) -> (i32, i32, i32) {
    %c0_i32 = arith.constant 0 : i32
    %c0_i32_0 = arith.constant 0 : i32
    return %arg0, %arg1, %c0_i32 : i32, i32, i32
  }
  func.func @transform_1(%arg0: i32, %arg1: i32) -> (i32, i32, i32) {
    %c0_i32 = arith.constant 0 : i32
    %c0_i32_0 = arith.constant 0 : i32
    return %arg0, %arg1, %c0_i32 : i32, i32, i32
  }
}

</mosaic_0001>

<llo_original>
// kernel: tpu_custom_call.1
$region0: #{tpu_custom_call.1}
  #allocation0 [shape = 'u32[]', space=smem, size = 0x4, offset = 0x4, fixed_abs, tag = 'smem constant byte address 0x4 - core index']
  #allocation1 [shape = 'u32[72,128]{1,0:T(1,128)}', space=vmem, size = 0x9000, scoped, tag = 'internal scratch']
  %s0 = inlined_call_operand.hbm [shape: f32[6,2,128], index: 0, kind: input, shape index: {}]
  %s1 = inlined_call_operand.hbm [shape: f32[6,2,128], index: 1, kind: output, shape index: {}]
  %s2 = sld [smem:[#allocation0]]
  $region41: #{tpu_custom_call.1} parent=0
    _
  %s4 = ssub.s32 1, %s2
  %s5 = scalar_select 0, %s4, %s2
  $region1: #{tpu_custom_call.1} parent=0
    #allocation2 [shape = 'u8[2048]{0}', space=vmem, size = 0x800, scoped, tag = 'input window, operand 0']
    #allocation3 [shape = 's32[2]{0}', space=sflag, size = 0x8, scoped, tag = 'scoped memory for tpu_custom_call.1']
    #allocation4 [shape = 's32[2]{0}', space=sflag, size = 0x8, scoped, tag = 'scoped memory for tpu_custom_call.1']
    #allocation5 [shape = 'u8[2048]{0}', space=vmem, size = 0x800, scoped, tag = 'output window, operand 0']
    %6 = vsyncpa [#allocation3], 0
    %s7 = scalar_lea.sflag [#allocation3], 1
    %8 = vsyncpa %s7, 0
    %9 = vsyncpa [#allocation4], 0
    %s10 = scalar_lea.sflag [#allocation4], 1
    %11 = vsyncpa %s10, 0
    loop: start=0, step=1, limit=8
    $region2: #{tpu_custom_call.1} parent=1 // loop_pre_header
      _
    $region3: #{tpu_custom_call.1} parent=1 // loop_header
      %s13 = sphi 0, %s17
      %p14 = scmp.ge.s32.totalorder %s13, 8
      %s20 = sphi 0, %s32
      %s21 = sphi 0, %s28
      %s22 = sphi 0, %s20
      %s23 = sphi 0, %s21
      %s24 = sphi 0, %s22
      %s25 = sphi 0, %s23
      %s37 = sphi 0, %s39
      %s40 = sphi 0, %s37
      %s41 = sphi 0, %s40
      %s57 = sphi 0, %s41
      %s65 = sphi 0, %s67
      %s68 = sphi 0, %s65
      %s69 = sphi 0, %s68
      %s85 = sphi 0, %s69
    $region4: #{tpu_custom_call.1} parent=1 // loop_header_branch
      %16 = sbr.rel (%p14) target = $region8
    $region5: #{tpu_custom_call.1} parent=1 // loop_body
      %s18 = ssub.s32 %s13, 1
      %s19 = ssub.s32 %s13, 2
      %s26 = sadd.s32 1, %s21
      %p27 = scmp.ge.s32.totalorder %s26, 1
      %s28 = scalar_select %p27, 0, %s26
      %s29 = sadd.s32 1, %s20
      %s30 = scalar_select %p27, %s29, %s20
      %p31 = scmp.ge.s32.totalorder %s30, 6
      %s32 = scalar_select %p31, 0, %s30
      %s33 = ssub.s32 %s20, %s32
      %s34 = ssub.s32 %s21, %s28
      %s35 = sor.u32 %s33, %s34
      %p36 = scmp.eq.s32.totalorder %s35, 0
      %s38 = sadd.s32 %s37, 1
      %s39 = scalar_select %p36, %s37, %s38
      %p42 = pneg %p36
      %p43 = scmp.eq.s32.totalorder %s13, 5
      %p44 = por %p42, %p43
      %p45 = scmp.ne.s32.totalorder %s37, %s40
      %p46 = scmp.eq.s32.totalorder %s13, 0
      %p47 = por %p45, %p46
      %p48 = scmp.ne.s32.totalorder %s37, %s40
      %p49 = scmp.eq.s32.totalorder %s18, 5
      %p50 = por %p48, %p49
      %p51 = scmp.ne.s32.totalorder %s40, %s41
      %p52 = scmp.eq.s32.totalorder %s18, 0
      %p53 = por %p51, %p52
      %p54 = scmp.ne.s32.totalorder %s40, %s41
      %p55 = scmp.eq.s32.totalorder %s19, 5
      %p56 = por %p54, %p55
      %p58 = scmp.ne.s32.totalorder %s41, %s57
      %p59 = scmp.eq.s32.totalorder %s19, 0
      %p60 = por %p58, %p59
      %s61 = ssub.s32 %s20, %s32
      %s62 = ssub.s32 %s21, %s28
      %s63 = sor.u32 %s61, %s62
      %p64 = scmp.eq.s32.totalorder %s63, 0
      %s66 = sadd.s32 %s65, 1
      %s67 = scalar_select %p64, %s65, %s66
      %p70 = pneg %p64
      %p71 = scmp.eq.s32.totalorder %s13, 5
      %p72 = por %p70, %p71
      %p73 = scmp.ne.s32.totalorder %s65, %s68
      %p74 = scmp.eq.s32.totalorder %s13, 0
      %p75 = por %p73, %p74
      %p76 = scmp.ne.s32.totalorder %s65, %s68
      %p77 = scmp.eq.s32.totalorder %s18, 5
      %p78 = por %p76, %p77
      %p79 = scmp.ne.s32.totalorder %s68, %s69
      %p80 = scmp.eq.s32.totalorder %s18, 0
      %p81 = por %p79, %p80
      %p82 = scmp.ne.s32.totalorder %s68, %s69
      %p83 = scmp.eq.s32.totalorder %s19, 5
      %p84 = por %p82, %p83
      %p86 = scmp.ne.s32.totalorder %s69, %s85
      %p87 = scmp.eq.s32.totalorder %s19, 0
      %p88 = por %p86, %p87
      %p89 = scmp.le.s32.totalorder 1, %s13
      %p90 = scmp.lt.s32.totalorder %s13, 7
      %p91 = pnand %p89, %p90
      %p92 = pneg %p91
      // Predicated region
      $region9: #{tpu_custom_call.1} parent=5 // pred_check
        _
      $region10: #{tpu_custom_call.1} parent=5 // pred_check_branch
        %94 = sbr.rel (%p91) target = $region12
      $region11: #{tpu_custom_call.1} parent=5 // pred_region
        %s95 = ssub.s32 %s13, 1
      $region12: #{tpu_custom_call.1} parent=5 // pred_fallthru
        _
      %p96 = scmp.lt.s32.totalorder %s13, 6
      // Predicated region
      $region13: #{tpu_custom_call.1} parent=5 // pred_check
        %p97 = pneg %p96
      $region14: #{tpu_custom_call.1} parent=5 // pred_check_branch
        %99 = sbr.rel (%p97) target = $region16
      $region15: #{tpu_custom_call.1} parent=5 // pred_region
        // Predicated region
        $region17: #{tpu_custom_call.1} parent=15 // pred_check
          %p100 = pneg %p47
        $region18: #{tpu_custom_call.1} parent=15 // pred_check_branch
          %102 = sbr.rel (%p100) target = $region20
        $region19: #{tpu_custom_call.1} parent=15 // pred_region
          %s103 = sand.u32 %s37, 1
          %s104 = scalar_lea.sflag [#allocation3], %s103
          %s105 = sand.u32 %s37, 1
          %s106 = smul.addr %s105, 2
          %s107 = scalar_lea.vmem [#allocation2], %s106
          %109 = vsyncadd %s104, 0
          %s110 = sadd.s32 %s21, %s20
          %s111 = smul.addr %s110, 2
          %s112 = scalar_lea.hbm %s0, %s111
          %s114 = sshll.u32 %s112, 4
          %s115 = int_to_ptr.hbm [resolvable:$true] %s114
          %s116 = sshll.u32 %s107, 4
          %s117 = int_to_ptr.vmem [resolvable:$true] %s116
          %119 = dma.hbm_to_vmem [thread:$0]  %s115, 32, %s117, %s104
        $region20: #{tpu_custom_call.1} parent=15 // pred_fallthru
          _
      $region16: #{tpu_custom_call.1} parent=5 // pred_fallthru
        _
      %p120 = scmp.le.s32.totalorder 1, %s13
      %p121 = scmp.lt.s32.totalorder %s13, 7
      %p122 = pnand %p120, %p121
      %p123 = pneg %p122
      // Predicated region
      $region21: #{tpu_custom_call.1} parent=5 // pred_check
        _
      $region22: #{tpu_custom_call.1} parent=5 // pred_check_branch
        %125 = sbr.rel (%p122) target = $region24
      $region23: #{tpu_custom_call.1} parent=5 // pred_region
        %s126 = ssub.s32 %s13, 1
        %s127 = sand.u32 %s40, 1
        %s128 = scalar_lea.sflag [#allocation3], %s127
        %s129 = sand.u32 %s40, 1
        %s130 = smul.addr %s129, 2
        %s131 = scalar_lea.vmem [#allocation2], %s130
        // Predicated region
        $region25: #{tpu_custom_call.1} parent=23 // pred_check
          %p132 = pneg %p53
        $region26: #{tpu_custom_call.1} parent=23 // pred_check_branch
          %134 = sbr.rel (%p132) target = $region28
        $region27: #{tpu_custom_call.1} parent=23 // pred_region
          %136 = dma.done %s128, 32
        $region28: #{tpu_custom_call.1} parent=23 // pred_fallthru
          _
        %s137 = sand.u32 %s40, 1
        %s138 = scalar_lea.sflag [#allocation3], %s137
        %s139 = sand.u32 %s40, 1
        %s140 = smul.addr %s139, 2
        %s141 = scalar_lea.vmem [#allocation2], %s140
        %p142 = pneg %p53
        %p143 = pneg %p50
        %p144 = pneg %p81
        %p145 = pneg %p78
        %s146 = sand.u32 %s68, 1
        %s147 = scalar_lea.sflag [#allocation4], %s146
        %s148 = sand.u32 %s68, 1
        %s149 = smul.addr %s148, 2
        %s150 = scalar_lea.vmem [#allocation5], %s149
        %p151 = scmp.lt.s32.totalorder %s22, 0
        %s152 = ssub.s32 0, %s22
        %s153 = scalar_select %p151, %s152, %s22
        %s154 = sdiv.u32.pop %s153, 3
        %s155 = srem.u32.pop %s153, 3
        %s156 = ssub.s32 0, %s155
        %s157 = scalar_select %p151, %s156, %s155
        %p158 = scmp.ne.s32.totalorder %s157, 0
        %p159 = scmp.lt.s32.totalorder %s157, 0
        %p160 = pnand %p159, %p158
        %p161 = pneg %p160
        %s162 = sadd.s32 %s157, 3
        %s163 = scalar_select %p161, %s162, %s157
        %p164 = scmp.eq.s32.totalorder %s163, 0
        %p165 = scmp.eq.s32.totalorder %s163, 1
        %s166 = scalar_select %p165, 2.232143, 2.2222223
        %s167 = scalar_select %p164, 2.183406, %s166
        %s168 = scalar_select %p165, 0.19642857, 0.41777778
        %s169 = scalar_select %p164, 0.06550218, %s168
        %v170 = vld [vmem:[%s131] sm:$0x3]
        %v171 = vstv %s167
        %v172 = vmul.f32 %v170, %v171
        %v173 = vstv %s169
        %v174 = vadd.f32 %v172, %v173
        %175 = vst [vmem:[%s150] sm:$0x3] %v174
        %s176 = sand.u32 %s68, 1
        %s177 = scalar_lea.sflag [#allocation4], %s176
        %s178 = sand.u32 %s68, 1
        %s179 = smul.addr %s178, 2
        %s180 = scalar_lea.vmem [#allocation5], %s179
        // Predicated region
        $region29: #{tpu_custom_call.1} parent=23 // pred_check
          %p181 = pneg %p78
        $region30: #{tpu_custom_call.1} parent=23 // pred_check_branch
          %183 = sbr.rel (%p181) target = $region32
        $region31: #{tpu_custom_call.1} parent=23 // pred_region
          %185 = vsyncadd %s177, 0
          %s186 = sadd.s32 %s23, %s22
          %s187 = smul.addr %s186, 2
          %s188 = scalar_lea.hbm %s1, %s187
          %s190 = sshll.u32 %s180, 4
          %s191 = int_to_ptr.vmem [resolvable:$true] %s190
          %s192 = sshll.u32 %s188, 4
          %s193 = int_to_ptr.hbm [resolvable:$true] %s192
          %195 = dma.vmem_to_hbm [thread:$0]  %s191, 32, %s193, %s177
        $region32: #{tpu_custom_call.1} parent=23 // pred_fallthru
          _
      $region24: #{tpu_custom_call.1} parent=5 // pred_fallthru
        _
      %p196 = scmp.le.s32.totalorder 2, %s13
      // Predicated region
      $region33: #{tpu_custom_call.1} parent=5 // pred_check
        %p197 = pneg %p196
      $region34: #{tpu_custom_call.1} parent=5 // pred_check_branch
        %199 = sbr.rel (%p197) target = $region36
      $region35: #{tpu_custom_call.1} parent=5 // pred_region
        %s200 = ssub.s32 %s13, 2
        // Predicated region
        $region37: #{tpu_custom_call.1} parent=35 // pred_check
          %p201 = pneg %p84
        $region38: #{tpu_custom_call.1} parent=35 // pred_check_branch
          %203 = sbr.rel (%p201) target = $region40
        $region39: #{tpu_custom_call.1} parent=35 // pred_region
          %s204 = sand.u32 %s69, 1
          %s205 = scalar_lea.sflag [#allocation4], %s204
          %s206 = sand.u32 %s69, 1
          %s207 = smul.addr %s206, 2
          %s208 = scalar_lea.vmem [#allocation5], %s207
          %210 = dma.done %s205, 32
        $region40: #{tpu_custom_call.1} parent=35 // pred_fallthru
          _
      $region36: #{tpu_custom_call.1} parent=5 // pred_fallthru
        _
    $region6: #{tpu_custom_call.1} parent=1 // loop_footer
      %s17 = sadd.s32 1, %s13
    $region7: #{tpu_custom_call.1} parent=1 // loop_footer_branch
      %12 = sbr.rel target = $region3
    $region8: #{tpu_custom_call.1} parent=1 // loop_exit
      _
    %211 = vsyncpa [#allocation3], 1
    %s212 = scalar_lea.sflag [#allocation3], 1
    %213 = vsyncpa %s212, 1
    %214 = vsyncpa [#allocation4], 1
    %s215 = scalar_lea.sflag [#allocation4], 1
    %216 = vsyncpa %s215, 1

</llo_original>
